<compile_context>
chip_gen: v7x
topology: tpu7x:2x2x1
jax: 0.10.0
libtpu: 0.0.40
codegen_flags: <defaults>
</compile_context>

<pallas_src>
import functools

import jax
import jax.numpy as jnp
from jax.experimental import pallas as pl
from jax.experimental.pallas import tpu as pltpu


def _make_kernel(act_dtype):
    def autoencoder_kernel(
        x_ref,                      # [8, TB]   activations, batch in lanes
        v1_ref, c1_ref,             # [80, 8],  [80, 1]
        v2_ref, c2_ref,             # [8, 80],  [8, 1]   (rows 4..7 zero-padded)
        v3_ref, c3_ref,             # [80, 8],  [80, 1]  (cols 4..7 zero-padded)
        v4_ref, c4_ref,             # [8, 80],  [8, 1]
        enc_ref, dec_ref,           # [4, TB],  [8, TB]
    ):
        def layer(w_ref, b_ref, a):
            # MXU matmul with f32 accumulation, bias add in f32, then a single
            # EUP tanh in the activation dtype (bf16 tanh is 2x on v6e/v7x).
            z = jnp.dot(w_ref[...], a, preferred_element_type=jnp.float32)
            z = z + b_ref[...]
            return jnp.tanh(z.astype(act_dtype))

        t1 = layer(v1_ref, c1_ref, x_ref[...])   # [80, TB]
        t2 = layer(v2_ref, c2_ref, t1)           # [8, TB]; rows 4..7 == tanh(0) == 0
        t3 = layer(v3_ref, c3_ref, t2)           # [80, TB]
        t4 = layer(v4_ref, c4_ref, t3)           # [8, TB]

        # Only the returned values need the sigmoid's output affine.
        enc_ref[...] = (0.5 * t2[:4, :] + 0.5).astype(enc_ref.dtype)
        dec_ref[...] = (0.5 * t4 + 0.5).astype(dec_ref.dtype)

    return autoencoder_kernel


def _fold_params(params, act_dtype):
    """Fold sigmoid(z) = 0.5*tanh(0.5*z)+0.5 into the layer weights.

    Kernel layer i computes t_i = tanh(V_i u + c_i) with u = x (i=1) or
    u = t_{i-1} (i>1).  Exactness:
      V_1 = 0.5*W_1,  c_1 = 0.5*b_1
      V_i = 0.25*W_i, c_i = 0.5*b_i + 0.25*W_i.sum(axis=1)   (i >= 2)
    Layer 2/3's 4-wide bottleneck is zero-padded to 8 (exact).
    """
    w1, b1 = params["w1"], params["b1"]
    w2, b2 = params["w2"], params["b2"]
    w3, b3 = params["w3"], params["b3"]
    w4, b4 = params["w4"], params["b4"]

    v1 = 0.5 * w1
    c1 = 0.5 * b1
    v2 = 0.25 * w2
    c2 = 0.5 * b2 + 0.25 * jnp.sum(w2, axis=1, keepdims=True)
    v3 = 0.25 * w3
    c3 = 0.5 * b3 + 0.25 * jnp.sum(w3, axis=1, keepdims=True)
    v4 = 0.25 * w4
    c4 = 0.5 * b4 + 0.25 * jnp.sum(w4, axis=1, keepdims=True)

    # Pad the K=4 bottleneck to K=8: zero output rows of layer2 give t2 rows
    # 4..7 == 0; zero input cols of layer3 ignore them. Result is unchanged.
    v2 = jnp.pad(v2, ((0, 4), (0, 0)))          # [8, 80]
    c2 = jnp.pad(c2, ((0, 4), (0, 0)))          # [8, 1]
    v3 = jnp.pad(v3, ((0, 0), (0, 4)))          # [80, 8]

    f32 = jnp.float32
    return (
        v1.astype(act_dtype), c1.astype(f32),
        v2.astype(act_dtype), c2.astype(f32),
        v3.astype(act_dtype), c3.astype(f32),
        v4.astype(act_dtype), c4.astype(f32),
    )


def big_autoencoder_forward(x, params, *, tb=16384, act_dtype=jnp.float32):
    """x: [B, 8] float32. params: torch-layout w{i}: [out, in], b{i}: [out, 1].

    Returns (encoded [B, 4], decoded [B, 8]) in act_dtype.

    tb: batch tile (rows per grid step), rounded to a lane multiple (128).
        Default 16384 keeps per-step HBM traffic well above the ~0.35 us fixed
        pipeline overhead while fitting comfortably in VMEM on v5e/v6e/v7x
        (vmem_limit_bytes is raised explicitly for v5e's 16 MiB default).
    act_dtype: activation / IO dtype. jnp.bfloat16 recommended on v6e/v7x
        (halves EUP tanh cost + HBM bytes); keep f32 on v5e.
    """
    B, fin = x.shape
    assert fin == 8, f"expected 8 input features, got {fin}"

    lane = 128
    b_lane = pl.cdiv(B, lane) * lane
    tile = max(lane, (min(tb, b_lane) // lane) * lane)
    b_pad = pl.cdiv(b_lane, tile) * tile
    grid = (b_pad // tile,)

    folded = _fold_params(params, act_dtype)

    # Batch goes to the lane dim.  With allow_input_fusion on this operand,
    # XLA may fuse the transpose+pad into the pallas_call instead of
    # materializing xt in HBM.
    xt = jnp.pad(x.astype(act_dtype).T, ((0, 0), (0, b_pad - B)))   # [8, b_pad]

    def const_spec(arr):
        return pl.BlockSpec(arr.shape, lambda i: (0, 0))            # VMEM-resident

    act_bytes = jnp.dtype(act_dtype).itemsize
    # Live-VMEM estimate: double-buffered x/enc/dec tiles + two [80, tile] f32
    # pre-activation temporaries.  Clamp into [32 MiB, 64 MiB] so big tiles
    # compile on v5e (16 MiB default scoped limit) without exceeding v7x's
    # 64 MiB/TC physical VMEM.
    est_vmem = tile * (2 * (8 + 4 + 8) * act_bytes + 2 * 80 * 4) + (2 << 20)
    vmem_limit = int(min(max(est_vmem, 32 << 20), 64 << 20))

    cost = pl.CostEstimate(
        flops=2 * b_pad * (80 * 8 + 8 * 80 + 80 * 8 + 8 * 80),
        transcendentals=b_pad * (80 + 8 + 80 + 8),
        bytes_accessed=b_pad * (8 + 4 + 8) * act_bytes,
    )

    enc_t, dec_t = pl.pallas_call(
        _make_kernel(act_dtype),
        out_shape=(
            jax.ShapeDtypeStruct((4, b_pad), act_dtype),
            jax.ShapeDtypeStruct((8, b_pad), act_dtype),
        ),
        grid=grid,
        in_specs=[
            pl.BlockSpec((8, tile), lambda i: (0, i)),    # x tile, pipelined
            *(const_spec(w) for w in folded),             # weights stay resident
        ],
        out_specs=(
            pl.BlockSpec((4, tile), lambda i: (0, i)),
            pl.BlockSpec((8, tile), lambda i: (0, i)),
        ),
        compiler_params=pltpu.CompilerParams(
            dimension_semantics=("parallel",),            # megacore sharding on v7x
            vmem_limit_bytes=vmem_limit,
            allow_input_fusion=[True] + [False] * 8,      # fuse pad/transpose of x
        ),
        cost_estimate=cost,
    )(xt, *folded)

    # Back to [B, feat] only to match the PyTorch interface; a real consumer
    # should read the [feat, B] lane-major layout directly to avoid this
    # extra HBM round trip.
    enc = enc_t.T[:B]
    dec = dec_t.T[:B]
    return enc, dec


def init_params(key):
    """Torch-layout init mimicking nn.Linear default: U[-1/sqrt(in), 1/sqrt(in)].

    w{i}: [out, in], b{i}: [out, 1].
    """
    dims = [(8, 80), (80, 4), (4, 80), (80, 8)]  # (fan_in, fan_out)
    params = {}
    for i, (fan_in, fan_out) in enumerate(dims, start=1):
        key, kw, kb = jax.random.split(key, 3)
        bound = 1.0 / jnp.sqrt(float(fan_in))
        params[f"w{i}"] = jax.random.uniform(
            kw, (fan_out, fan_in), jnp.float32, -bound, bound
        )
        params[f"b{i}"] = jax.random.uniform(
            kb, (fan_out, 1), jnp.float32, -bound, bound
        )
    return params


def reference_forward(x, params):
    """Pure-JAX reference matching the PyTorch semantics (x @ W.T + b)."""
    h = jax.nn.sigmoid(x @ params["w1"].T + params["b1"].T)
    enc = jax.nn.sigmoid(h @ params["w2"].T + params["b2"].T)
    h = jax.nn.sigmoid(enc @ params["w3"].T + params["b3"].T)
    dec = jax.nn.sigmoid(h @ params["w4"].T + params["b4"].T)
    return enc, dec


if __name__ == "__main__":
    key = jax.random.PRNGKey(0)
    key, kx = jax.random.split(key)

    # Small demo: B=300 with tb=256 exercises multiple grid steps plus the
    # ragged-tail batch padding (correctness only; real runs use tb>=16384).
    B = 300
    x = jax.random.normal(kx, (B, 8), jnp.float32)
    params = init_params(key)

    # f32 path (default; the right choice on v5e).
    fwd_f32 = jax.jit(functools.partial(big_autoencoder_forward, tb=256))
    enc, dec = jax.block_until_ready(fwd_f32(x, params))

    enc_ref, dec_ref = reference_forward(x, params)
    assert enc.shape == (B, 4) and dec.shape == (B, 8)
    assert jnp.allclose(enc, enc_ref, atol=1e-4, rtol=1e-4)
    assert jnp.allclose(dec, dec_ref, atol=1e-4, rtol=1e-4)

    # bf16 activation/IO path (recommended on v6e / v7x); looser tolerance.
    fwd_bf16 = jax.jit(
        functools.partial(big_autoencoder_forward, act_dtype=jnp.bfloat16)
    )
    enc_b, dec_b = jax.block_until_ready(fwd_bf16(x, params))
    assert jnp.allclose(enc_b.astype(jnp.float32), enc_ref, atol=5e-2)
    assert jnp.allclose(dec_b.astype(jnp.float32), dec_ref, atol=5e-2)

    print("KERNEL_OK")
</pallas_src>

<mosaic_0001>
module attributes {stable_mosaic.version = 11 : i64} {
  func.func @autoencoder_kernel(%arg0: i32, %arg1: memref<8x256xf32, #tpu.memory_space<vmem>>, %arg2: memref<80x8xf32, #tpu.memory_space<vmem>>, %arg3: memref<80x1xf32, #tpu.memory_space<vmem>>, %arg4: memref<8x80xf32, #tpu.memory_space<vmem>>, %arg5: memref<8x1xf32, #tpu.memory_space<vmem>>, %arg6: memref<80x8xf32, #tpu.memory_space<vmem>>, %arg7: memref<80x1xf32, #tpu.memory_space<vmem>>, %arg8: memref<8x80xf32, #tpu.memory_space<vmem>>, %arg9: memref<8x1xf32, #tpu.memory_space<vmem>>, %arg10: memref<4x256xf32, #tpu.memory_space<vmem>>, %arg11: memref<8x256xf32, #tpu.memory_space<vmem>>) attributes {dimension_semantics = [#tpu.dimension_semantics<parallel>], iteration_bounds = array<i64: 2>, scalar_prefetch = 0 : i64, scratch_operands = 0 : i64, tpu.core_type = #tpu.core_type<tc>, window_params = [{transform_indices = @transform_0, window_bounds = array<i64: 8, 256>}, {pipeline_mode = #tpu.pipeline_mode<synchronous>, transform_indices = @transform_1, window_bounds = array<i64: 80, 8>}, {pipeline_mode = #tpu.pipeline_mode<synchronous>, transform_indices = @transform_2, window_bounds = array<i64: 80, 1>}, {pipeline_mode = #tpu.pipeline_mode<synchronous>, transform_indices = @transform_3, window_bounds = array<i64: 8, 80>}, {pipeline_mode = #tpu.pipeline_mode<synchronous>, transform_indices = @transform_4, window_bounds = array<i64: 8, 1>}, {pipeline_mode = #tpu.pipeline_mode<synchronous>, transform_indices = @transform_5, window_bounds = array<i64: 80, 8>}, {pipeline_mode = #tpu.pipeline_mode<synchronous>, transform_indices = @transform_6, window_bounds = array<i64: 80, 1>}, {pipeline_mode = #tpu.pipeline_mode<synchronous>, transform_indices = @transform_7, window_bounds = array<i64: 8, 80>}, {pipeline_mode = #tpu.pipeline_mode<synchronous>, transform_indices = @transform_8, window_bounds = array<i64: 8, 1>}, {transform_indices = @transform_9, window_bounds = array<i64: 4, 256>}, {transform_indices = @transform_10, window_bounds = array<i64: 8, 256>}]} {
    %c0 = arith.constant 0 : index
    %c0_0 = arith.constant 0 : index
    %0 = vector.load %arg1[%c0, %c0_0] : memref<8x256xf32, #tpu.memory_space<vmem>>, vector<8x256xf32>
    %c0_1 = arith.constant 0 : index
    %c0_2 = arith.constant 0 : index
    %1 = vector.load %arg2[%c0_1, %c0_2] : memref<80x8xf32, #tpu.memory_space<vmem>>, vector<80x8xf32>
    %cst = arith.constant dense<0.000000e+00> : vector<80x256xf32>
    %2 = tpu.matmul %1, %0, %cst {dimension_numbers = #tpu.dot_dimension_numbers<[1], [0], [0], [1], [0, 0, 1, 1], [], []>} : vector<80x8xf32>, vector<8x256xf32>, vector<80x256xf32> -> vector<80x256xf32>
    %c0_3 = arith.constant 0 : index
    %c0_4 = arith.constant 0 : index
    %3 = vector.load %arg3[%c0_3, %c0_4] : memref<80x1xf32, #tpu.memory_space<vmem>>, vector<80x1xf32>
    %4 = vector.broadcast %3 : vector<80x1xf32> to vector<80x256xf32>
    %5 = arith.addf %2, %4 : vector<80x256xf32>
    %6 = math.tanh %5 : vector<80x256xf32>
    %c0_5 = arith.constant 0 : index
    %c0_6 = arith.constant 0 : index
    %7 = vector.load %arg4[%c0_5, %c0_6] : memref<8x80xf32, #tpu.memory_space<vmem>>, vector<8x80xf32>
    %cst_7 = arith.constant dense<0.000000e+00> : vector<8x256xf32>
    %8 = tpu.matmul %7, %6, %cst_7 {dimension_numbers = #tpu.dot_dimension_numbers<[1], [0], [0], [1], [0, 0, 1, 1], [], []>} : vector<8x80xf32>, vector<80x256xf32>, vector<8x256xf32> -> vector<8x256xf32>
    %c0_8 = arith.constant 0 : index
    %c0_9 = arith.constant 0 : index
    %9 = vector.load %arg5[%c0_8, %c0_9] : memref<8x1xf32, #tpu.memory_space<vmem>>, vector<8x1xf32>
    %10 = vector.broadcast %9 : vector<8x1xf32> to vector<8x256xf32>
    %11 = arith.addf %8, %10 : vector<8x256xf32>
    %12 = math.tanh %11 : vector<8x256xf32>
    %c0_10 = arith.constant 0 : index
    %c0_11 = arith.constant 0 : index
    %13 = vector.load %arg6[%c0_10, %c0_11] : memref<80x8xf32, #tpu.memory_space<vmem>>, vector<80x8xf32>
    %cst_12 = arith.constant dense<0.000000e+00> : vector<80x256xf32>
    %14 = tpu.matmul %13, %12, %cst_12 {dimension_numbers = #tpu.dot_dimension_numbers<[1], [0], [0], [1], [0, 0, 1, 1], [], []>} : vector<80x8xf32>, vector<8x256xf32>, vector<80x256xf32> -> vector<80x256xf32>
    %c0_13 = arith.constant 0 : index
    %c0_14 = arith.constant 0 : index
    %15 = vector.load %arg7[%c0_13, %c0_14] : memref<80x1xf32, #tpu.memory_space<vmem>>, vector<80x1xf32>
    %16 = vector.broadcast %15 : vector<80x1xf32> to vector<80x256xf32>
    %17 = arith.addf %14, %16 : vector<80x256xf32>
    %18 = math.tanh %17 : vector<80x256xf32>
    %c0_15 = arith.constant 0 : index
    %c0_16 = arith.constant 0 : index
    %19 = vector.load %arg8[%c0_15, %c0_16] : memref<8x80xf32, #tpu.memory_space<vmem>>, vector<8x80xf32>
    %cst_17 = arith.constant dense<0.000000e+00> : vector<8x256xf32>
    %20 = tpu.matmul %19, %18, %cst_17 {dimension_numbers = #tpu.dot_dimension_numbers<[1], [0], [0], [1], [0, 0, 1, 1], [], []>} : vector<8x80xf32>, vector<80x256xf32>, vector<8x256xf32> -> vector<8x256xf32>
    %c0_18 = arith.constant 0 : index
    %c0_19 = arith.constant 0 : index
    %21 = vector.load %arg9[%c0_18, %c0_19] : memref<8x1xf32, #tpu.memory_space<vmem>>, vector<8x1xf32>
    %22 = vector.broadcast %21 : vector<8x1xf32> to vector<8x256xf32>
    %23 = arith.addf %20, %22 : vector<8x256xf32>
    %24 = math.tanh %23 : vector<8x256xf32>
    %25 = vector.extract_strided_slice %12 {offsets = [0, 0], sizes = [4, 256], strides = [1, 1]} : vector<8x256xf32> to vector<4x256xf32>
    %cst_20 = arith.constant 5.000000e-01 : f32
    %26 = vector.broadcast %cst_20 : f32 to vector<4x256xf32>
    %27 = arith.mulf %26, %25 : vector<4x256xf32>
    %cst_21 = arith.constant 5.000000e-01 : f32
    %28 = vector.broadcast %cst_21 : f32 to vector<4x256xf32>
    %29 = arith.addf %27, %28 : vector<4x256xf32>
    %c0_22 = arith.constant 0 : index
    %c0_23 = arith.constant 0 : index
    %30 = vector.load %arg10[%c0_22, %c0_23] : memref<4x256xf32, #tpu.memory_space<vmem>>, vector<4x256xf32>
    tpu.vector_store %arg10[%c0_22, %c0_23], %29 {strides = array<i32>} : memref<4x256xf32, #tpu.memory_space<vmem>>, vector<4x256xf32>,
    %cst_24 = arith.constant 5.000000e-01 : f32
    %31 = vector.broadcast %cst_24 : f32 to vector<8x256xf32>
    %32 = arith.mulf %31, %24 : vector<8x256xf32>
    %cst_25 = arith.constant 5.000000e-01 : f32
    %33 = vector.broadcast %cst_25 : f32 to vector<8x256xf32>
    %34 = arith.addf %32, %33 : vector<8x256xf32>
    %c0_26 = arith.constant 0 : index
    %c0_27 = arith.constant 0 : index
    %35 = vector.load %arg11[%c0_26, %c0_27] : memref<8x256xf32, #tpu.memory_space<vmem>>, vector<8x256xf32>
    tpu.vector_store %arg11[%c0_26, %c0_27], %34 {strides = array<i32>} : memref<8x256xf32, #tpu.memory_space<vmem>>, vector<8x256xf32>,
    return
  }
  func.func @transform_0(%arg0: i32) -> (i32, i32) {
    %c0_i32 = arith.constant 0 : i32
    %c0_i32_0 = arith.constant 0 : i32
    return %c0_i32, %arg0 : i32, i32
  }
  func.func @transform_1(%arg0: i32) -> (i32, i32) {
    %c0_i32 = arith.constant 0 : i32
    %c0_i32_0 = arith.constant 0 : i32
    %c0_i32_1 = arith.constant 0 : i32
    return %c0_i32, %c0_i32_0 : i32, i32
  }
  func.func @transform_2(%arg0: i32) -> (i32, i32) {
    %c0_i32 = arith.constant 0 : i32
    %c0_i32_0 = arith.constant 0 : i32
    %c0_i32_1 = arith.constant 0 : i32
    return %c0_i32, %c0_i32_0 : i32, i32
  }
  func.func @transform_3(%arg0: i32) -> (i32, i32) {
    %c0_i32 = arith.constant 0 : i32
    %c0_i32_0 = arith.constant 0 : i32
    %c0_i32_1 = arith.constant 0 : i32
    return %c0_i32, %c0_i32_0 : i32, i32
  }
  func.func @transform_4(%arg0: i32) -> (i32, i32) {
    %c0_i32 = arith.constant 0 : i32
    %c0_i32_0 = arith.constant 0 : i32
    %c0_i32_1 = arith.constant 0 : i32
    return %c0_i32, %c0_i32_0 : i32, i32
  }
  func.func @transform_5(%arg0: i32) -> (i32, i32) {
    %c0_i32 = arith.constant 0 : i32
    %c0_i32_0 = arith.constant 0 : i32
    %c0_i32_1 = arith.constant 0 : i32
    return %c0_i32, %c0_i32_0 : i32, i32
  }
  func.func @transform_6(%arg0: i32) -> (i32, i32) {
    %c0_i32 = arith.constant 0 : i32
    %c0_i32_0 = arith.constant 0 : i32
    %c0_i32_1 = arith.constant 0 : i32
    return %c0_i32, %c0_i32_0 : i32, i32
  }
  func.func @transform_7(%arg0: i32) -> (i32, i32) {
    %c0_i32 = arith.constant 0 : i32
    %c0_i32_0 = arith.constant 0 : i32
    %c0_i32_1 = arith.constant 0 : i32
    return %c0_i32, %c0_i32_0 : i32, i32
  }
  func.func @transform_8(%arg0: i32) -> (i32, i32) {
    %c0_i32 = arith.constant 0 : i32
    %c0_i32_0 = arith.constant 0 : i32
    %c0_i32_1 = arith.constant 0 : i32
    return %c0_i32, %c0_i32_0 : i32, i32
  }
  func.func @transform_9(%arg0: i32) -> (i32, i32) {
    %c0_i32 = arith.constant 0 : i32
    %c0_i32_0 = arith.constant 0 : i32
    return %c0_i32, %arg0 : i32, i32
  }
  func.func @transform_10(%arg0: i32) -> (i32, i32) {
    %c0_i32 = arith.constant 0 : i32
    %c0_i32_0 = arith.constant 0 : i32
    return %c0_i32, %arg0 : i32, i32
  }
}

</mosaic_0001>

<llo_original>
// kernel: big_autoencoder_forward.2
$region0: #{big_autoencoder_forward.2}
  #allocation0 [shape = 'u32[]', space=smem, size = 0x4, offset = 0x4, fixed_abs, tag = 'smem constant byte address 0x4 - core index']
  #allocation1 [shape = 'u32[144,128]{1,0:T(1,128)}', space=vmem, size = 0x12000, scoped, tag = 'internal scratch']
  #allocation2 [shape = 'u32[2048]{0}', space=vmem, size = 0x2000, scoped, tag = 'scoped memory for big_autoencoder_forward.2']
  #allocation3 [shape = 'u32[2048]{0}', space=vmem, size = 0x2000, scoped, tag = 'scoped memory for big_autoencoder_forward.2']
  #allocation4 [shape = 'u32[2048]{0}', space=vmem, size = 0x2000, scoped, tag = 'scoped memory for big_autoencoder_forward.2']
  #allocation5 [shape = 'u32[2048]{0}', space=vmem, size = 0x2000, scoped, tag = 'scoped memory for big_autoencoder_forward.2']
  #allocation6 [shape = 'u32[2048]{0}', space=vmem, size = 0x2000, scoped, tag = 'scoped memory for big_autoencoder_forward.2']
  %s0 = inlined_call_operand.vmem [shape: f32[80,8], index: 0, kind: input, shape index: {}]
  %s1 = inlined_call_operand.vmem [shape: f32[80,1], index: 1, kind: input, shape index: {}]
  %s2 = inlined_call_operand.vmem [shape: f32[8,80], index: 2, kind: input, shape index: {}]
  %s3 = inlined_call_operand.vmem [shape: f32[8,1], index: 3, kind: input, shape index: {}]
  %s4 = inlined_call_operand.vmem [shape: f32[80,8], index: 4, kind: input, shape index: {}]
  %s5 = inlined_call_operand.vmem [shape: f32[80,1], index: 5, kind: input, shape index: {}]
  %s6 = inlined_call_operand.vmem [shape: f32[8,80], index: 6, kind: input, shape index: {}]
  %s7 = inlined_call_operand.vmem [shape: f32[8,1], index: 7, kind: input, shape index: {}]
  %s8 = inlined_call_operand.vmem [shape: f32[8,300], index: 8, kind: input, shape index: {}]
  %s9 = inlined_call_operand.<no memory space> [shape: f32[], index: 9, kind: input, shape index: {}]
  %s10 = inlined_call_operand.vmem [shape: f32[4,512], index: 10, kind: output, shape index: {0}]
  %s11 = inlined_call_operand.vmem [shape: f32[8,512], index: 11, kind: output, shape index: {1}]
  %12 = xla_tuple %s10, %s11
  %s13 = sld [smem:[#allocation0]]
  $region77: #{big_autoencoder_forward.2} parent=0
    _
  %s15 = ssub.s32 1, %s13
  %s16 = scalar_select 0, %s15, %s13
  %v17 = vstv %s9
  loop: start=0, step=1, limit=4
  $region2: #{big_autoencoder_forward.2} parent=0 // loop_pre_header
    _
  $region3: #{big_autoencoder_forward.2} parent=0 // loop_header
    %s19 = sphi 0, %s23
    %p20 = scmp.ge.s32.totalorder %s19, 4
    %s29 = sphi 0, %s31
    %s32 = sphi 0, %s29
    %s33 = sphi 0, %s32
    %s49 = sphi 0, %s33
    %s53 = sphi 0, %s53
    %s55 = sphi 0, %s53
    %s56 = sphi 0, %s55
    %s70 = sphi 0, %s56
    %s74 = sphi 0, %s74
    %s76 = sphi 0, %s74
    %s77 = sphi 0, %s76
    %s91 = sphi 0, %s77
    %s95 = sphi 0, %s95
    %s97 = sphi 0, %s95
    %s98 = sphi 0, %s97
    %s112 = sphi 0, %s98
    %s116 = sphi 0, %s116
    %s118 = sphi 0, %s116
    %s119 = sphi 0, %s118
    %s133 = sphi 0, %s119
    %s137 = sphi 0, %s137
    %s139 = sphi 0, %s137
    %s140 = sphi 0, %s139
    %s154 = sphi 0, %s140
    %s158 = sphi 0, %s158
    %s160 = sphi 0, %s158
    %s161 = sphi 0, %s160
    %s175 = sphi 0, %s161
    %s179 = sphi 0, %s179
    %s181 = sphi 0, %s179
    %s182 = sphi 0, %s181
    %s196 = sphi 0, %s182
    %s200 = sphi 0, %s200
    %s202 = sphi 0, %s200
    %s203 = sphi 0, %s202
    %s217 = sphi 0, %s203
    %s223 = sphi 0, %s225
    %s226 = sphi 0, %s223
    %s227 = sphi 0, %s226
    %s243 = sphi 0, %s227
    %s249 = sphi 0, %s251
    %s252 = sphi 0, %s249
    %s253 = sphi 0, %s252
    %s269 = sphi 0, %s253
  $region4: #{big_autoencoder_forward.2} parent=0 // loop_header_branch
    %22 = sbr.rel (%p20) target = $region8
  $region5: #{big_autoencoder_forward.2} parent=0 // loop_body
    %s24 = ssub.s32 %s19, 1
    %s25 = ssub.s32 %s19, 2
    %s26 = sadd.s32 %s19, 1
    %s27 = ssub.s32 %s19, %s26
    %p28 = scmp.eq.s32.totalorder %s27, 0
    %s30 = sadd.s32 %s29, 1
    %s31 = scalar_select %p28, %s29, %s30
    %p34 = pneg %p28
    %p35 = scmp.eq.s32.totalorder %s19, 1
    %p36 = por %p34, %p35
    %p37 = scmp.ne.s32.totalorder %s29, %s32
    %p38 = scmp.eq.s32.totalorder %s19, 0
    %p39 = por %p37, %p38
    %p40 = scmp.ne.s32.totalorder %s29, %s32
    %p41 = scmp.eq.s32.totalorder %s24, 1
    %p42 = por %p40, %p41
    %p43 = scmp.ne.s32.totalorder %s32, %s33
    %p44 = scmp.eq.s32.totalorder %s24, 0
    %p45 = por %p43, %p44
    %p46 = scmp.ne.s32.totalorder %s32, %s33
    %p47 = scmp.eq.s32.totalorder %s25, 1
    %p48 = por %p46, %p47
    %p50 = scmp.ne.s32.totalorder %s33, %s49
    %p51 = scmp.eq.s32.totalorder %s25, 0
    %p52 = por %p50, %p51
    %s54 = sadd.s32 %s53, 1
    %p57 = scmp.eq.s32.totalorder %s19, 1
    %p58 = scmp.ne.s32.totalorder %s53, %s55
    %p59 = scmp.eq.s32.totalorder %s19, 0
    %p60 = por %p58, %p59
    %p61 = scmp.ne.s32.totalorder %s53, %s55
    %p62 = scmp.eq.s32.totalorder %s24, 1
    %p63 = por %p61, %p62
    %p64 = scmp.ne.s32.totalorder %s55, %s56
    %p65 = scmp.eq.s32.totalorder %s24, 0
    %p66 = por %p64, %p65
    %p67 = scmp.ne.s32.totalorder %s55, %s56
    %p68 = scmp.eq.s32.totalorder %s25, 1
    %p69 = por %p67, %p68
    %p71 = scmp.ne.s32.totalorder %s56, %s70
    %p72 = scmp.eq.s32.totalorder %s25, 0
    %p73 = por %p71, %p72
    %s75 = sadd.s32 %s74, 1
    %p78 = scmp.eq.s32.totalorder %s19, 1
    %p79 = scmp.ne.s32.totalorder %s74, %s76
    %p80 = scmp.eq.s32.totalorder %s19, 0
    %p81 = por %p79, %p80
    %p82 = scmp.ne.s32.totalorder %s74, %s76
    %p83 = scmp.eq.s32.totalorder %s24, 1
    %p84 = por %p82, %p83
    %p85 = scmp.ne.s32.totalorder %s76, %s77
    %p86 = scmp.eq.s32.totalorder %s24, 0
    %p87 = por %p85, %p86
    %p88 = scmp.ne.s32.totalorder %s76, %s77
    %p89 = scmp.eq.s32.totalorder %s25, 1
    %p90 = por %p88, %p89
    %p92 = scmp.ne.s32.totalorder %s77, %s91
    %p93 = scmp.eq.s32.totalorder %s25, 0
    %p94 = por %p92, %p93
    %s96 = sadd.s32 %s95, 1
    %p99 = scmp.eq.s32.totalorder %s19, 1
    %p100 = scmp.ne.s32.totalorder %s95, %s97
    %p101 = scmp.eq.s32.totalorder %s19, 0
    %p102 = por %p100, %p101
    %p103 = scmp.ne.s32.totalorder %s95, %s97
    %p104 = scmp.eq.s32.totalorder %s24, 1
    %p105 = por %p103, %p104
    %p106 = scmp.ne.s32.totalorder %s97, %s98
    %p107 = scmp.eq.s32.totalorder %s24, 0
    %p108 = por %p106, %p107
    %p109 = scmp.ne.s32.totalorder %s97, %s98
    %p110 = scmp.eq.s32.totalorder %s25, 1
    %p111 = por %p109, %p110
    %p113 = scmp.ne.s32.totalorder %s98, %s112
    %p114 = scmp.eq.s32.totalorder %s25, 0
    %p115 = por %p113, %p114
    %s117 = sadd.s32 %s116, 1
    %p120 = scmp.eq.s32.totalorder %s19, 1
    %p121 = scmp.ne.s32.totalorder %s116, %s118
    %p122 = scmp.eq.s32.totalorder %s19, 0
    %p123 = por %p121, %p122
    %p124 = scmp.ne.s32.totalorder %s116, %s118
    %p125 = scmp.eq.s32.totalorder %s24, 1
    %p126 = por %p124, %p125
    %p127 = scmp.ne.s32.totalorder %s118, %s119
    %p128 = scmp.eq.s32.totalorder %s24, 0
    %p129 = por %p127, %p128
    %p130 = scmp.ne.s32.totalorder %s118, %s119
    %p131 = scmp.eq.s32.totalorder %s25, 1
    %p132 = por %p130, %p131
    %p134 = scmp.ne.s32.totalorder %s119, %s133
    %p135 = scmp.eq.s32.totalorder %s25, 0
    %p136 = por %p134, %p135
    %s138 = sadd.s32 %s137, 1
    %p141 = scmp.eq.s32.totalorder %s19, 1
    %p142 = scmp.ne.s32.totalorder %s137, %s139
    %p143 = scmp.eq.s32.totalorder %s19, 0
    %p144 = por %p142, %p143
    %p145 = scmp.ne.s32.totalorder %s137, %s139
    %p146 = scmp.eq.s32.totalorder %s24, 1
    %p147 = por %p145, %p146
    %p148 = scmp.ne.s32.totalorder %s139, %s140
    %p149 = scmp.eq.s32.totalorder %s24, 0
    %p150 = por %p148, %p149
    %p151 = scmp.ne.s32.totalorder %s139, %s140
    %p152 = scmp.eq.s32.totalorder %s25, 1
    %p153 = por %p151, %p152
    %p155 = scmp.ne.s32.totalorder %s140, %s154
    %p156 = scmp.eq.s32.totalorder %s25, 0
    %p157 = por %p155, %p156
    %s159 = sadd.s32 %s158, 1
    %p162 = scmp.eq.s32.totalorder %s19, 1
    %p163 = scmp.ne.s32.totalorder %s158, %s160
    %p164 = scmp.eq.s32.totalorder %s19, 0
    %p165 = por %p163, %p164
    %p166 = scmp.ne.s32.totalorder %s158, %s160
    %p167 = scmp.eq.s32.totalorder %s24, 1
    %p168 = por %p166, %p167
    %p169 = scmp.ne.s32.totalorder %s160, %s161
    %p170 = scmp.eq.s32.totalorder %s24, 0
    %p171 = por %p169, %p170
    %p172 = scmp.ne.s32.totalorder %s160, %s161
    %p173 = scmp.eq.s32.totalorder %s25, 1
    %p174 = por %p172, %p173
    %p176 = scmp.ne.s32.totalorder %s161, %s175
    %p177 = scmp.eq.s32.totalorder %s25, 0
    %p178 = por %p176, %p177
    %s180 = sadd.s32 %s179, 1
    %p183 = scmp.eq.s32.totalorder %s19, 1
    %p184 = scmp.ne.s32.totalorder %s179, %s181
    %p185 = scmp.eq.s32.totalorder %s19, 0
    %p186 = por %p184, %p185
    %p187 = scmp.ne.s32.totalorder %s179, %s181
    %p188 = scmp.eq.s32.totalorder %s24, 1
    %p189 = por %p187, %p188
    %p190 = scmp.ne.s32.totalorder %s181, %s182
    %p191 = scmp.eq.s32.totalorder %s24, 0
    %p192 = por %p190, %p191
    %p193 = scmp.ne.s32.totalorder %s181, %s182
    %p194 = scmp.eq.s32.totalorder %s25, 1
    %p195 = por %p193, %p194
    %p197 = scmp.ne.s32.totalorder %s182, %s196
    %p198 = scmp.eq.s32.totalorder %s25, 0
    %p199 = por %p197, %p198
    %s201 = sadd.s32 %s200, 1
    %p204 = scmp.eq.s32.totalorder %s19, 1
    %p205 = scmp.ne.s32.totalorder %s200, %s202
    %p206 = scmp.eq.s32.totalorder %s19, 0
    %p207 = por %p205, %p206
    %p208 = scmp.ne.s32.totalorder %s200, %s202
    %p209 = scmp.eq.s32.totalorder %s24, 1
    %p210 = por %p208, %p209
    %p211 = scmp.ne.s32.totalorder %s202, %s203
    %p212 = scmp.eq.s32.totalorder %s24, 0
    %p213 = por %p211, %p212
    %p214 = scmp.ne.s32.totalorder %s202, %s203
    %p215 = scmp.eq.s32.totalorder %s25, 1
    %p216 = por %p214, %p215
    %p218 = scmp.ne.s32.totalorder %s203, %s217
    %p219 = scmp.eq.s32.totalorder %s25, 0
    %p220 = por %p218, %p219
    %s221 = ssub.s32 %s19, %s26
    %p222 = scmp.eq.s32.totalorder %s221, 0
    %s224 = sadd.s32 %s223, 1
    %s225 = scalar_select %p222, %s223, %s224
    %p228 = pneg %p222
    %p229 = scmp.eq.s32.totalorder %s19, 1
    %p230 = por %p228, %p229
    %p231 = scmp.ne.s32.totalorder %s223, %s226
    %p232 = scmp.eq.s32.totalorder %s19, 0
    %p233 = por %p231, %p232
    %p234 = scmp.ne.s32.totalorder %s223, %s226
    %p235 = scmp.eq.s32.totalorder %s24, 1
    %p236 = por %p234, %p235
    %p237 = scmp.ne.s32.totalorder %s226, %s227
    %p238 = scmp.eq.s32.totalorder %s24, 0
    %p239 = por %p237, %p238
    %p240 = scmp.ne.s32.totalorder %s226, %s227
    %p241 = scmp.eq.s32.totalorder %s25, 1
    %p242 = por %p240, %p241
    %p244 = scmp.ne.s32.totalorder %s227, %s243
    %p245 = scmp.eq.s32.totalorder %s25, 0
    %p246 = por %p244, %p245
    %s247 = ssub.s32 %s19, %s26
    %p248 = scmp.eq.s32.totalorder %s247, 0
    %s250 = sadd.s32 %s249, 1
    %s251 = scalar_select %p248, %s249, %s250
    %p254 = pneg %p248
    %p255 = scmp.eq.s32.totalorder %s19, 1
    %p256 = por %p254, %p255
    %p257 = scmp.ne.s32.totalorder %s249, %s252
    %p258 = scmp.eq.s32.totalorder %s19, 0
    %p259 = por %p257, %p258
    %p260 = scmp.ne.s32.totalorder %s249, %s252
    %p261 = scmp.eq.s32.totalorder %s24, 1
    %p262 = por %p260, %p261
    %p263 = scmp.ne.s32.totalorder %s252, %s253
    %p264 = scmp.eq.s32.totalorder %s24, 0
    %p265 = por %p263, %p264
    %p266 = scmp.ne.s32.totalorder %s252, %s253
    %p267 = scmp.eq.s32.totalorder %s25, 1
    %p268 = por %p266, %p267
    %p270 = scmp.ne.s32.totalorder %s253, %s269
    %p271 = scmp.eq.s32.totalorder %s25, 0
    %p272 = por %p270, %p271
    %p273 = scmp.le.s32.totalorder 1, %s19
    %p274 = scmp.lt.s32.totalorder %s19, 3
    %p275 = pnand %p273, %p274
    %p276 = pneg %p275
    // Predicated region
    $region9: #{big_autoencoder_forward.2} parent=5 // pred_check
      _
    $region10: #{big_autoencoder_forward.2} parent=5 // pred_check_branch
      %278 = sbr.rel (%p275) target = $region12
    $region11: #{big_autoencoder_forward.2} parent=5 // pred_region
      %s279 = ssub.s32 %s19, 1
      // Predicated region
      $region13: #{big_autoencoder_forward.2} parent=11 // pred_check
        %p280 = pneg %p66
      $region14: #{big_autoencoder_forward.2} parent=11 // pred_check_branch
        %282 = sbr.rel (%p280) target = $region16
      $region15: #{big_autoencoder_forward.2} parent=11 // pred_region
        _
      $region16: #{big_autoencoder_forward.2} parent=11 // pred_fallthru
        _
      // Predicated region
      $region17: #{big_autoencoder_forward.2} parent=11 // pred_check
        %p283 = pneg %p87
      $region18: #{big_autoencoder_forward.2} parent=11 // pred_check_branch
        %285 = sbr.rel (%p283) target = $region20
      $region19: #{big_autoencoder_forward.2} parent=11 // pred_region
        _
      $region20: #{big_autoencoder_forward.2} parent=11 // pred_fallthru
        _
      // Predicated region
      $region21: #{big_autoencoder_forward.2} parent=11 // pred_check
        %p286 = pneg %p108
      $region22: #{big_autoencoder_forward.2} parent=11 // pred_check_branch
        %288 = sbr.rel (%p286) target = $region24
      $region23: #{big_autoencoder_forward.2} parent=11 // pred_region
        _
      $region24: #{big_autoencoder_forward.2} parent=11 // pred_fallthru
        _
      // Predicated region
      $region25: #{big_autoencoder_forward.2} parent=11 // pred_check
        %p289 = pneg %p129
      $region26: #{big_autoencoder_forward.2} parent=11 // pred_check_branch
        %291 = sbr.rel (%p289) target = $region28
      $region27: #{big_autoencoder_forward.2} parent=11 // pred_region
        _
      $region28: #{big_autoencoder_forward.2} parent=11 // pred_fallthru
        _
      // Predicated region
      $region29: #{big_autoencoder_forward.2} parent=11 // pred_check
        %p292 = pneg %p150
      $region30: #{big_autoencoder_forward.2} parent=11 // pred_check_branch
        %294 = sbr.rel (%p292) target = $region32
      $region31: #{big_autoencoder_forward.2} parent=11 // pred_region
        _
      $region32: #{big_autoencoder_forward.2} parent=11 // pred_fallthru
        _
      // Predicated region
      $region33: #{big_autoencoder_forward.2} parent=11 // pred_check
        %p295 = pneg %p171
      $region34: #{big_autoencoder_forward.2} parent=11 // pred_check_branch
        %297 = sbr.rel (%p295) target = $region36
      $region35: #{big_autoencoder_forward.2} parent=11 // pred_region
        _
      $region36: #{big_autoencoder_forward.2} parent=11 // pred_fallthru
        _
      // Predicated region
      $region37: #{big_autoencoder_forward.2} parent=11 // pred_check
        %p298 = pneg %p192
      $region38: #{big_autoencoder_forward.2} parent=11 // pred_check_branch
        %300 = sbr.rel (%p298) target = $region40
      $region39: #{big_autoencoder_forward.2} parent=11 // pred_region
        _
      $region40: #{big_autoencoder_forward.2} parent=11 // pred_fallthru
        _
      // Predicated region
      $region41: #{big_autoencoder_forward.2} parent=11 // pred_check
        %p301 = pneg %p213
      $region42: #{big_autoencoder_forward.2} parent=11 // pred_check_branch
        %303 = sbr.rel (%p301) target = $region44
      $region43: #{big_autoencoder_forward.2} parent=11 // pred_region
        _
      $region44: #{big_autoencoder_forward.2} parent=11 // pred_fallthru
        _
    $region12: #{big_autoencoder_forward.2} parent=5 // pred_fallthru
      _
    %p304 = scmp.lt.s32.totalorder %s19, 2
    // Predicated region
    $region45: #{big_autoencoder_forward.2} parent=5 // pred_check
      %p305 = pneg %p304
    $region46: #{big_autoencoder_forward.2} parent=5 // pred_check_branch
      %307 = sbr.rel (%p305) target = $region48
    $region47: #{big_autoencoder_forward.2} parent=5 // pred_region
      // Predicated region
      $region49: #{big_autoencoder_forward.2} parent=47 // pred_check
        %p308 = pneg %p39
      $region50: #{big_autoencoder_forward.2} parent=47 // pred_check_branch
        %310 = sbr.rel (%p308) target = $region52
      $region51: #{big_autoencoder_forward.2} parent=47 // pred_region
        %s311 = smul.u32 2, %s19
        %s312 = ssub.s32 3, %s311
        %p313 = scmp.lt.s32.totalorder %s312, 2
        %s314 = scalar_select %p313, %s312, 2
        %s315 = smul.u32 128, %s314
        %p316 = scmp.lt.s32.totalorder %s311, 2
        %s317 = scalar_select %p316, %s311, 2
        %s318 = smul.addr %s317, 8
        %s319 = scalar_lea.vmem %s8, %s318
        %s320 = smul.u32 2, %s19
        %s321 = ssub.s32 3, %s320
        %p322 = scmp.lt.s32.totalorder %s321, 2
        %s323 = scalar_select %p322, %s321, 2
        %s324 = smul.u32 128, %s323
      $region52: #{big_autoencoder_forward.2} parent=47 // pred_fallthru
        _
    $region48: #{big_autoencoder_forward.2} parent=5 // pred_fallthru
      _
    %p325 = scmp.le.s32.totalorder 1, %s19
    %p326 = scmp.lt.s32.totalorder %s19, 3
    %p327 = pnand %p325, %p326
    %p328 = pneg %p327
    // Predicated region
    $region53: #{big_autoencoder_forward.2} parent=5 // pred_check
      _
    $region54: #{big_autoencoder_forward.2} parent=5 // pred_check_branch
      %330 = sbr.rel (%p327) target = $region56
    $region55: #{big_autoencoder_forward.2} parent=5 // pred_region
      #allocation7 [shape = 'u8[8192]{0}', space=vmem, size = 0x2000, dematerialized = true, scoped, tag = 'FusionAdapter Buffer %fusion.1 = f32[8,512]{1,0:T(8,128)} fusion(%param_8.1, %param_9), kind=kLoop, calls=%fused_computation.4.clone, metadata={op_name="jit(big_autoencoder_forward)/jit(_pad)/pad" stack_frame_id=27}']
      %s331 = ssub.s32 %s19, 1
      %s332 = smul.u32 2, %s24
      %s333 = ssub.s32 3, %s332
      %p334 = scmp.lt.s32.totalorder %s333, 2
      %s335 = scalar_select %p334, %s333, 2
      %s336 = smul.u32 128, %s335
      %p337 = scmp.lt.s32.totalorder %s332, 2
      %s338 = scalar_select %p337, %s332, 2
      %s339 = smul.addr %s338, 8
      %s340 = scalar_lea.vmem %s8, %s339
      %p341 = pneg %p45
      %p342 = pneg %p42
      %p343 = pneg %p66
      %p344 = pneg %p63
      %p345 = pneg %p87
      %p346 = pneg %p84
      %p347 = pneg %p108
      %p348 = pneg %p105
      %p349 = pneg %p129
      %p350 = pneg %p126
      %p351 = pneg %p150
      %p352 = pneg %p147
      %p353 = pneg %p171
      %p354 = pneg %p168
      %p355 = pneg %p192
      %p356 = pneg %p189
      %p357 = pneg %p213
      %p358 = pneg %p210
      %p359 = pneg %p239
      %p360 = pneg %p236
      %s361 = smul.u32 2, %s24
      %p362 = scmp.lt.s32.totalorder %s361, 3
      %s363 = scalar_select %p362, %s361, 3
      %s364 = smul.addr %s363, 4
      %s365 = scalar_lea.vmem %s10, %s364
      %p366 = pneg %p265
      %p367 = pneg %p262
      %s368 = smul.u32 2, %s24
      %p369 = scmp.lt.s32.totalorder %s368, 3
      %s370 = scalar_select %p369, %s368, 3
      %s371 = smul.addr %s370, 8
      %s372 = scalar_lea.vmem %s11, %s371
      %s373 = smul.u32 2, %s24
      %s374 = ssub.s32 3, %s373
      %p375 = scmp.lt.s32.totalorder %s374, 2
      %s376 = scalar_select %p375, %s374, 2
      %s377 = smul.u32 128, %s376
      %p378 = scmp.lt.s32.totalorder %s373, 2
      %s379 = scalar_select %p378, %s373, 2
      %s380 = smul.addr %s379, 8
      %s381 = scalar_lea.vmem %s8, %s380
      %s382 = smul.u32 2, %s24
      %s383 = ssub.s32 3, %s382
      %p384 = scmp.lt.s32.totalorder %s383, 2
      %s385 = scalar_select %p384, %s383, 2
      %s386 = smul.u32 128, %s385
      %s387 = smul.u32 2, %s24
      %p388 = scmp.lt.s32.totalorder %s387, 3
      %s389 = scalar_select %p388, %s387, 3
      %s390 = smul.addr %s389, 4
      %s391 = scalar_lea.vmem %s10, %s390
      %s392 = smul.u32 2, %s24
      %s393 = smul.u32 2, %s24
      %p394 = scmp.lt.s32.totalorder %s393, 3
      %s395 = scalar_select %p394, %s393, 3
      %s396 = smul.addr %s395, 8
      %s397 = scalar_lea.vmem %s11, %s396
      %s398 = smul.u32 2, %s24
      %s399 = ssub.s32 2, %s382
      %p400 = scmp.lt.s32.totalorder %s399, 0
      %s401 = scalar_select %p400, 0, 255
      %v402 = vld [vmem:[%s381] sm:%s401]
      %s403 = ssub.s32 2, %s382
      %v404 = vstv %s403
      %vm405 = vcmp.lt.s32.totalorder %v404, 0
      %v406 = vsel %vm405, %v17, %v402
      %s407 = smul.addr %s382, 128
      %v408 = vlaneseq
      %v409 = vand.u32 %v408, 127
      %v410 = vstv %s407
      %v411 = vadd.s32 %v409, %v410
      %vm412 = vcmp.lt.s32.totalorder %v411, 300
      %v413 = vsel %vm412, %v406, %v17
      %415 = vst [vmem:[#allocation7] sm:$0xff] %v413
      %s416 = scalar_lea.vmem %s381, 8
      %s417 = sadd.s32 %s382, 1
      %s418 = ssub.s32 2, %s417
      %p419 = scmp.lt.s32.totalorder %s418, 0
      %s420 = scalar_select %p419, 0, 255
      %v421 = vld [vmem:[%s416] sm:%s420]
      %s422 = sadd.s32 %s382, 1
      %s423 = ssub.s32 2, %s422
      %v424 = vstv %s423
      %vm425 = vcmp.lt.s32.totalorder %v424, 0
      %v426 = vsel %vm425, %v17, %v421
      %s427 = sadd.s32 %s382, 1
      %s428 = smul.addr %s427, 128
      %v429 = vlaneseq
      %v430 = vand.u32 %v429, 127
      %v431 = vstv %s428
      %v432 = vadd.s32 %v430, %v431
      %vm433 = vcmp.lt.s32.totalorder %v432, 300
      %v434 = vsel %vm433, %v426, %v17
      %s435 = scalar_lea.vmem [#allocation7], 8
      %437 = vst [vmem:[%s435] sm:$0xff] %v434
      %v438 = vld [vmem:[#allocation7] sm:$0xff]
      %v439 = vld [vmem:[#allocation7 + $0x8] sm:$0xff]
      %v440 = vld [vmem:[%s0] sm:$0xff]
      %v441 = vld [vmem:[%s0 + $0x8] sm:$0xff]
      %v442 = vld [vmem:[%s0 + $0x10] sm:$0xff]
      %v443 = vld [vmem:[%s0 + $0x18] sm:$0xff]
      %v444 = vld [vmem:[%s0 + $0x20] sm:$0xff]
      %v445 = vld [vmem:[%s0 + $0x28] sm:$0xff]
      %v446 = vld [vmem:[%s0 + $0x30] sm:$0xff]
      %v447 = vld [vmem:[%s0 + $0x38] sm:$0xff]
      %v448 = vld [vmem:[%s0 + $0x40] sm:$0xff]
      %v449 = vld [vmem:[%s0 + $0x48] sm:$0xff]
      %v450 = vld [vmem:[%s1] sm:$0xff]
      %v451 = vld [vmem:[%s1 + $0x8] sm:$0xff]
      %v452 = vld [vmem:[%s1 + $0x10] sm:$0xff]
      %v453 = vld [vmem:[%s1 + $0x18] sm:$0xff]
      %v454 = vld [vmem:[%s1 + $0x20] sm:$0xff]
      %v455 = vld [vmem:[%s1 + $0x28] sm:$0xff]
      %v456 = vld [vmem:[%s1 + $0x30] sm:$0xff]
      %v457 = vld [vmem:[%s1 + $0x38] sm:$0xff]
      %v458 = vld [vmem:[%s1 + $0x40] sm:$0xff]
      %v459 = vld [vmem:[%s1 + $0x48] sm:$0xff]
      %461 = vset.pattern.permute.xlu0 0
      %462 = vperm.xlu0 %461, %v450
      %v463 = vpop.permute.xlu0 %462
      %466 = vset.pattern.permute.xlu0 0
      %467 = vperm.xlu0 %466, %v451
      %v468 = vpop.permute.xlu0 %467
      %471 = vset.pattern.permute.xlu0 0
      %472 = vperm.xlu0 %471, %v452
      %v473 = vpop.permute.xlu0 %472
      %476 = vset.pattern.permute.xlu0 0
      %477 = vperm.xlu0 %476, %v453
      %v478 = vpop.permute.xlu0 %477
      %481 = vset.pattern.permute.xlu0 0
      %482 = vperm.xlu0 %481, %v454
      %v483 = vpop.permute.xlu0 %482
      %486 = vset.pattern.permute.xlu0 0
      %487 = vperm.xlu0 %486, %v455
      %v488 = vpop.permute.xlu0 %487
      %491 = vset.pattern.permute.xlu0 0
      %492 = vperm.xlu0 %491, %v456
      %v493 = vpop.permute.xlu0 %492
      %496 = vset.pattern.permute.xlu0 0
      %497 = vperm.xlu0 %496, %v457
      %v498 = vpop.permute.xlu0 %497
      %501 = vset.pattern.permute.xlu0 0
      %502 = vperm.xlu0 %501, %v458
      %v503 = vpop.permute.xlu0 %502
      %506 = vset.pattern.permute.xlu0 0
      %507 = vperm.xlu0 %506, %v459
      %v508 = vpop.permute.xlu0 %507
      %vm510 = vcmask 64512
      %v512 = vsel %vm510, %v440, 0
      %v515 = vsel %vm510, %v441, 0
      %v518 = vsel %vm510, %v442, 0
      %v521 = vsel %vm510, %v443, 0
      %v524 = vsel %vm510, %v444, 0
      %v527 = vsel %vm510, %v445, 0
      %v530 = vsel %vm510, %v446, 0
      %v533 = vsel %vm510, %v447, 0
      %v536 = vsel %vm510, %v448, 0
      %v539 = vsel %vm510, %v449, 0
      %541 = vmatprep.subr.mxu0 %v439
      %542 = vmatpush1.msra.mxu0 %v438
      %543 = vmatprep.subr.mxu0 0.0
      %544 = vmatpush1.msra.mxu0 0.0
      %545 = vmatprep.subr.mxu0 0.0
      %546 = vmatpush1.msra.mxu0 0.0
      %547 = vmatprep.subr.mxu0 0.0
      %548 = vmatpush1.msra.mxu0 0.0
      %549 = vmatprep.subr.mxu0 0.0
      %550 = vmatpush1.msra.mxu0 0.0
      %551 = vmatprep.subr.mxu0 0.0
      %552 = vmatpush1.msra.mxu0 0.0
      %553 = vmatprep.subr.mxu0 0.0
      %554 = vmatpush1.msra.mxu0 0.0
      %555 = vmatprep.subr.mxu0 0.0
      %556 = vmatpush1.msra.mxu0 0.0
      %557 = vmatprep.subr.mxu0 0.0
      %558 = vmatpush1.msra.mxu0 0.0
      %559 = vmatprep.subr.mxu0 0.0
      %560 = vmatpush1.msra.mxu0 0.0
      %561 = vmatprep.subr.mxu0 0.0
      %562 = vmatpush1.msra.mxu0 0.0
      %563 = vmatprep.subr.mxu0 0.0
      %564 = vmatpush1.msra.mxu0 0.0
      %565 = vmatprep.subr.mxu0 0.0
      %566 = vmatpush1.msra.mxu0 0.0
      %567 = vmatprep.subr.mxu0 0.0
      %568 = vmatpush1.msra.mxu0 0.0
      %569 = vmatprep.subr.mxu0 0.0
      %570 = vmatpush1.msra.mxu0 0.0
      %571 = vmatprep.subr.mxu0 0.0
      %572 = vmatpush1.msra.mxu0 0.0
      %573 = vmatprep.subr.mxu0 0.0
      %574 = vmatpush1.msra.mxu0 0.0
      %575 = vmatprep.subr.mxu0 0.0
      %576 = vmatpush1.msra.mxu0 0.0
      %577 = vmatprep.subr.mxu0 0.0
      %578 = vmatpush1.msra.mxu0 0.0
      %579 = vmatprep.subr.mxu0 0.0
      %580 = vmatpush1.msra.mxu0 0.0
      %581 = vmatprep.subr.mxu0 0.0
      %582 = vmatpush1.msra.mxu0 0.0
      %583 = vmatprep.subr.mxu0 0.0
      %584 = vmatpush1.msra.mxu0 0.0
      %585 = vmatprep.subr.mxu0 0.0
      %586 = vmatpush1.msra.mxu0 0.0
      %587 = vmatprep.subr.mxu0 0.0
      %588 = vmatpush1.msra.mxu0 0.0
      %589 = vmatprep.subr.mxu0 0.0
      %590 = vmatpush1.msra.mxu0 0.0
      %591 = vmatprep.subr.mxu0 0.0
      %592 = vmatpush1.msra.mxu0 0.0
      %593 = vmatprep.subr.mxu0 0.0
      %594 = vmatpush1.msra.mxu0 0.0
      %595 = vmatprep.subr.mxu0 0.0
      %596 = vmatpush1.msra.mxu0 0.0
      %597 = vmatprep.subr.mxu0 0.0
      %598 = vmatpush1.msra.mxu0 0.0
      %599 = vmatprep.subr.mxu0 0.0
      %600 = vmatpush1.msra.mxu0 0.0
      %601 = vmatprep.subr.mxu0 0.0
      %602 = vmatpush1.msra.mxu0 0.0
      %603 = vmatprep.subr.mxu0 0.0
      %604 = vmatpush1.msra.mxu0 0.0
      %605 = vmatprep.mubr.f32.mxu0 0.0
      %606 = vmatmul.mubr.f32.gmra.mrb[0].mxu0 %v512
      %v607 = vpop.f32.mrb[0].mxu0
      %v608 = vadd.f32 %v463, %v607
      %v609 = vpop.f32.mrb[0].mxu0
      %v610 = vadd.f32 %v463, %v609
      %611 = vmatprep.mubr.f32.mxu0 0.0
      %612 = vmatmul.mubr.f32.gmra.mrb[0].mxu0 %v515
      %v613 = vpop.f32.mrb[0].mxu0
      %v614 = vadd.f32 %v468, %v613
      %v615 = vpop.f32.mrb[0].mxu0
      %v616 = vadd.f32 %v468, %v615
      %617 = vmatprep.mubr.f32.mxu0 0.0
      %618 = vmatmul.mubr.f32.gmra.mrb[0].mxu0 %v518
      %v619 = vpop.f32.mrb[0].mxu0
      %v620 = vadd.f32 %v473, %v619
      %v621 = vpop.f32.mrb[0].mxu0
      %v622 = vadd.f32 %v473, %v621
      %623 = vmatprep.mubr.f32.mxu0 0.0
      %624 = vmatmul.mubr.f32.gmra.mrb[0].mxu0 %v521
      %v625 = vpop.f32.mrb[0].mxu0
      %v626 = vadd.f32 %v478, %v625
      %v627 = vpop.f32.mrb[0].mxu0
      %v628 = vadd.f32 %v478, %v627
      %629 = vmatprep.mubr.f32.mxu0 0.0
      %630 = vmatmul.mubr.f32.gmra.mrb[0].mxu0 %v524
      %v631 = vpop.f32.mrb[0].mxu0
      %v632 = vadd.f32 %v483, %v631
      %v633 = vpop.f32.mrb[0].mxu0
      %v634 = vadd.f32 %v483, %v633
      %635 = vmatprep.mubr.f32.mxu0 0.0
      %636 = vmatmul.mubr.f32.gmra.mrb[0].mxu0 %v527
      %v637 = vpop.f32.mrb[0].mxu0
      %v638 = vadd.f32 %v488, %v637
      %v639 = vpop.f32.mrb[0].mxu0
      %v640 = vadd.f32 %v488, %v639
      %641 = vmatprep.mubr.f32.mxu0 0.0
      %642 = vmatmul.mubr.f32.gmra.mrb[0].mxu0 %v530
      %v643 = vpop.f32.mrb[0].mxu0
      %v644 = vadd.f32 %v493, %v643
      %v645 = vpop.f32.mrb[0].mxu0
      %v646 = vadd.f32 %v493, %v645
      %647 = vmatprep.mubr.f32.mxu0 0.0
      %648 = vmatmul.mubr.f32.gmra.mrb[0].mxu0 %v533
      %v649 = vpop.f32.mrb[0].mxu0
      %v650 = vadd.f32 %v498, %v649
      %v651 = vpop.f32.mrb[0].mxu0
      %v652 = vadd.f32 %v498, %v651
      %653 = vmatprep.mubr.f32.mxu0 0.0
      %654 = vmatmul.mubr.f32.gmra.mrb[0].mxu0 %v536
      %v655 = vpop.f32.mrb[0].mxu0
      %v656 = vadd.f32 %v503, %v655
      %v657 = vpop.f32.mrb[0].mxu0
      %v658 = vadd.f32 %v503, %v657
      %659 = vmatprep.mubr.f32.mxu0 0.0
      %660 = vmatmul.mubr.f32.gmra.mrb[0].mxu0 %v539
      %v661 = vpop.f32.mrb[0].mxu0
      %v662 = vadd.f32 %v508, %v661
      %v663 = vpop.f32.mrb[0].mxu0
      %v664 = vadd.f32 %v508, %v663
      %665 = vdwg.mxu0
      %v666 = vtanh.pop %v608
      %v667 = vtanh.pop %v610
      %v668 = vtanh.pop %v614
      %v669 = vtanh.pop %v616
      %v670 = vtanh.pop %v620
      %v671 = vtanh.pop %v622
      %v672 = vtanh.pop %v626
      %v673 = vtanh.pop %v628
      %v674 = vtanh.pop %v632
      %v675 = vtanh.pop %v634
      %v676 = vtanh.pop %v638
      %v677 = vtanh.pop %v640
      %v678 = vtanh.pop %v644
      %v679 = vtanh.pop %v646
      %v680 = vtanh.pop %v650
      %v681 = vtanh.pop %v652
      %v682 = vtanh.pop %v656
      %v683 = vtanh.pop %v658
      %v684 = vtanh.pop %v662
      %v685 = vtanh.pop %v664
      %v686 = vld [vmem:[%s2] sm:$0xff]
      %v687 = vld [vmem:[%s3] sm:$0xff]
      %689 = vset.pattern.permute.xlu0 0
      %690 = vperm.xlu0 %689, %v687
      %v691 = vpop.permute.xlu0 %690
      %vm693 = vcmask 654336
      %v695 = vsel %vm693, %v686, 0
      %697 = vmatprep.subr.mxu0 %v667
      %698 = vmatpush1.msra.mxu0 %v666
      %699 = vmatprep.subr.mxu0 %v669
      %700 = vmatpush1.msra.mxu0 %v668
      %701 = vmatprep.subr.mxu0 %v671
      %702 = vmatpush1.msra.mxu0 %v670
      %703 = vmatprep.subr.mxu0 %v673
      %704 = vmatpush1.msra.mxu0 %v672
      %705 = vmatprep.subr.mxu0 %v675
      %706 = vmatpush1.msra.mxu0 %v674
      %707 = vmatprep.subr.mxu0 %v677
      %708 = vmatpush1.msra.mxu0 %v676
      %709 = vmatprep.subr.mxu0 %v679
      %710 = vmatpush1.msra.mxu0 %v678
      %711 = vmatprep.subr.mxu0 %v681
      %712 = vmatpush1.msra.mxu0 %v680
      %713 = vmatprep.subr.mxu0 %v683
      %714 = vmatpush1.msra.mxu0 %v682
      %715 = vmatprep.subr.mxu0 %v685
      %716 = vmatpush1.msra.mxu0 %v684
      %717 = vmatprep.subr.mxu0 0.0
      %718 = vmatpush1.msra.mxu0 0.0
      %719 = vmatprep.subr.mxu0 0.0
      %720 = vmatpush1.msra.mxu0 0.0
      %721 = vmatprep.subr.mxu0 0.0
      %722 = vmatpush1.msra.mxu0 0.0
      %723 = vmatprep.subr.mxu0 0.0
      %724 = vmatpush1.msra.mxu0 0.0
      %725 = vmatprep.subr.mxu0 0.0
      %726 = vmatpush1.msra.mxu0 0.0
      %727 = vmatprep.subr.mxu0 0.0
      %728 = vmatpush1.msra.mxu0 0.0
      %729 = vmatprep.subr.mxu0 0.0
      %730 = vmatpush1.msra.mxu0 0.0
      %731 = vmatprep.subr.mxu0 0.0
      %732 = vmatpush1.msra.mxu0 0.0
      %733 = vmatprep.subr.mxu0 0.0
      %734 = vmatpush1.msra.mxu0 0.0
      %735 = vmatprep.subr.mxu0 0.0
      %736 = vmatpush1.msra.mxu0 0.0
      %737 = vmatprep.subr.mxu0 0.0
      %738 = vmatpush1.msra.mxu0 0.0
      %739 = vmatprep.subr.mxu0 0.0
      %740 = vmatpush1.msra.mxu0 0.0
      %741 = vmatprep.subr.mxu0 0.0
      %742 = vmatpush1.msra.mxu0 0.0
      %743 = vmatprep.subr.mxu0 0.0
      %744 = vmatpush1.msra.mxu0 0.0
      %745 = vmatprep.subr.mxu0 0.0
      %746 = vmatpush1.msra.mxu0 0.0
      %747 = vmatprep.subr.mxu0 0.0
      %748 = vmatpush1.msra.mxu0 0.0
      %749 = vmatprep.subr.mxu0 0.0
      %750 = vmatpush1.msra.mxu0 0.0
      %751 = vmatprep.subr.mxu0 0.0
      %752 = vmatpush1.msra.mxu0 0.0
      %753 = vmatprep.subr.mxu0 0.0
      %754 = vmatpush1.msra.mxu0 0.0
      %755 = vmatprep.subr.mxu0 0.0
      %756 = vmatpush1.msra.mxu0 0.0
      %757 = vmatprep.subr.mxu0 0.0
      %758 = vmatpush1.msra.mxu0 0.0
      %759 = vmatprep.subr.mxu0 0.0
      %760 = vmatpush1.msra.mxu0 0.0
      %761 = vmatprep.mubr.f32.mxu0 0.0
      %762 = vmatmul.mubr.f32.gmra.mrb[0].mxu0 %v695
      %v763 = vpop.f32.mrb[0].mxu0
      %v764 = vadd.f32 %v691, %v763
      %v765 = vpop.f32.mrb[0].mxu0
      %v766 = vadd.f32 %v691, %v765
      %767 = vdwg.mxu0
      %v768 = vtanh.pop %v764
      %v769 = vtanh.pop %v766
      %v770 = vld [vmem:[%s4] sm:$0xff]
      %v771 = vld [vmem:[%s4 + $0x8] sm:$0xff]
      %v772 = vld [vmem:[%s4 + $0x10] sm:$0xff]
      %v773 = vld [vmem:[%s4 + $0x18] sm:$0xff]
      %v774 = vld [vmem:[%s4 + $0x20] sm:$0xff]
      %v775 = vld [vmem:[%s4 + $0x28] sm:$0xff]
      %v776 = vld [vmem:[%s4 + $0x30] sm:$0xff]
      %v777 = vld [vmem:[%s4 + $0x38] sm:$0xff]
      %v778 = vld [vmem:[%s4 + $0x40] sm:$0xff]
      %v779 = vld [vmem:[%s4 + $0x48] sm:$0xff]
      %v780 = vld [vmem:[%s5] sm:$0xff]
      %v781 = vld [vmem:[%s5 + $0x8] sm:$0xff]
      %v782 = vld [vmem:[%s5 + $0x10] sm:$0xff]
      %v783 = vld [vmem:[%s5 + $0x18] sm:$0xff]
      %v784 = vld [vmem:[%s5 + $0x20] sm:$0xff]
      %v785 = vld [vmem:[%s5 + $0x28] sm:$0xff]
      %v786 = vld [vmem:[%s5 + $0x30] sm:$0xff]
      %v787 = vld [vmem:[%s5 + $0x38] sm:$0xff]
      %v788 = vld [vmem:[%s5 + $0x40] sm:$0xff]
      %v789 = vld [vmem:[%s5 + $0x48] sm:$0xff]
      %791 = vset.pattern.permute.xlu0 0
      %792 = vperm.xlu0 %791, %v780
      %v793 = vpop.permute.xlu0 %792
      %796 = vset.pattern.permute.xlu0 0
      %797 = vperm.xlu0 %796, %v781
      %v798 = vpop.permute.xlu0 %797
      %801 = vset.pattern.permute.xlu0 0
      %802 = vperm.xlu0 %801, %v782
      %v803 = vpop.permute.xlu0 %802
      %806 = vset.pattern.permute.xlu0 0
      %807 = vperm.xlu0 %806, %v783
      %v808 = vpop.permute.xlu0 %807
      %811 = vset.pattern.permute.xlu0 0
      %812 = vperm.xlu0 %811, %v784
      %v813 = vpop.permute.xlu0 %812
      %816 = vset.pattern.permute.xlu0 0
      %817 = vperm.xlu0 %816, %v785
      %v818 = vpop.permute.xlu0 %817
      %821 = vset.pattern.permute.xlu0 0
      %822 = vperm.xlu0 %821, %v786
      %v823 = vpop.permute.xlu0 %822
      %826 = vset.pattern.permute.xlu0 0
      %827 = vperm.xlu0 %826, %v787
      %v828 = vpop.permute.xlu0 %827
      %831 = vset.pattern.permute.xlu0 0
      %832 = vperm.xlu0 %831, %v788
      %v833 = vpop.permute.xlu0 %832
      %836 = vset.pattern.permute.xlu0 0
      %837 = vperm.xlu0 %836, %v789
      %v838 = vpop.permute.xlu0 %837
      %v841 = vsel %vm510, %v770, 0
      %v844 = vsel %vm510, %v771, 0
      %v847 = vsel %vm510, %v772, 0
      %v850 = vsel %vm510, %v773, 0
      %v853 = vsel %vm510, %v774, 0
      %v856 = vsel %vm510, %v775, 0
      %v859 = vsel %vm510, %v776, 0
      %v862 = vsel %vm510, %v777, 0
      %v865 = vsel %vm510, %v778, 0
      %v868 = vsel %vm510, %v779, 0
      %870 = vmatprep.subr.mxu0 %v769
      %871 = vmatpush1.msra.mxu0 %v768
      %872 = vmatprep.subr.mxu0 0.0
      %873 = vmatpush1.msra.mxu0 0.0
      %874 = vmatprep.subr.mxu0 0.0
      %875 = vmatpush1.msra.mxu0 0.0
      %876 = vmatprep.subr.mxu0 0.0
      %877 = vmatpush1.msra.mxu0 0.0
      %878 = vmatprep.subr.mxu0 0.0
      %879 = vmatpush1.msra.mxu0 0.0
      %880 = vmatprep.subr.mxu0 0.0
      %881 = vmatpush1.msra.mxu0 0.0
      %882 = vmatprep.subr.mxu0 0.0
      %883 = vmatpush1.msra.mxu0 0.0
      %884 = vmatprep.subr.mxu0 0.0
      %885 = vmatpush1.msra.mxu0 0.0
      %886 = vmatprep.subr.mxu0 0.0
      %887 = vmatpush1.msra.mxu0 0.0
      %888 = vmatprep.subr.mxu0 0.0
      %889 = vmatpush1.msra.mxu0 0.0
      %890 = vmatprep.subr.mxu0 0.0
      %891 = vmatpush1.msra.mxu0 0.0
      %892 = vmatprep.subr.mxu0 0.0
      %893 = vmatpush1.msra.mxu0 0.0
      %894 = vmatprep.subr.mxu0 0.0
      %895 = vmatpush1.msra.mxu0 0.0
      %896 = vmatprep.subr.mxu0 0.0
      %897 = vmatpush1.msra.mxu0 0.0
      %898 = vmatprep.subr.mxu0 0.0
      %899 = vmatpush1.msra.mxu0 0.0
      %900 = vmatprep.subr.mxu0 0.0
      %901 = vmatpush1.msra.mxu0 0.0
      %902 = vmatprep.subr.mxu0 0.0
      %903 = vmatpush1.msra.mxu0 0.0
      %904 = vmatprep.subr.mxu0 0.0
      %905 = vmatpush1.msra.mxu0 0.0
      %906 = vmatprep.subr.mxu0 0.0
      %907 = vmatpush1.msra.mxu0 0.0
      %908 = vmatprep.subr.mxu0 0.0
      %909 = vmatpush1.msra.mxu0 0.0
      %910 = vmatprep.subr.mxu0 0.0
      %911 = vmatpush1.msra.mxu0 0.0
      %912 = vmatprep.subr.mxu0 0.0
      %913 = vmatpush1.msra.mxu0 0.0
      %914 = vmatprep.subr.mxu0 0.0
      %915 = vmatpush1.msra.mxu0 0.0
      %916 = vmatprep.subr.mxu0 0.0
      %917 = vmatpush1.msra.mxu0 0.0
      %918 = vmatprep.subr.mxu0 0.0
      %919 = vmatpush1.msra.mxu0 0.0
      %920 = vmatprep.subr.mxu0 0.0
      %921 = vmatpush1.msra.mxu0 0.0
      %922 = vmatprep.subr.mxu0 0.0
      %923 = vmatpush1.msra.mxu0 0.0
      %924 = vmatprep.subr.mxu0 0.0
      %925 = vmatpush1.msra.mxu0 0.0
      %926 = vmatprep.subr.mxu0 0.0
      %927 = vmatpush1.msra.mxu0 0.0
      %928 = vmatprep.subr.mxu0 0.0
      %929 = vmatpush1.msra.mxu0 0.0
      %930 = vmatprep.subr.mxu0 0.0
      %931 = vmatpush1.msra.mxu0 0.0
      %932 = vmatprep.subr.mxu0 0.0
      %933 = vmatpush1.msra.mxu0 0.0
      %934 = vmatprep.mubr.f32.mxu0 0.0
      %935 = vmatmul.mubr.f32.gmra.mrb[0].mxu0 %v841
      %v936 = vpop.f32.mrb[0].mxu0
      %v937 = vadd.f32 %v793, %v936
      %v938 = vpop.f32.mrb[0].mxu0
      %v939 = vadd.f32 %v793, %v938
      %940 = vmatprep.mubr.f32.mxu0 0.0
      %941 = vmatmul.mubr.f32.gmra.mrb[0].mxu0 %v844
      %v942 = vpop.f32.mrb[0].mxu0
      %v943 = vadd.f32 %v798, %v942
      %v944 = vpop.f32.mrb[0].mxu0
      %v945 = vadd.f32 %v798, %v944
      %946 = vmatprep.mubr.f32.mxu0 0.0
      %947 = vmatmul.mubr.f32.gmra.mrb[0].mxu0 %v847
      %v948 = vpop.f32.mrb[0].mxu0
      %v949 = vadd.f32 %v803, %v948
      %v950 = vpop.f32.mrb[0].mxu0
      %v951 = vadd.f32 %v803, %v950
      %952 = vmatprep.mubr.f32.mxu0 0.0
      %953 = vmatmul.mubr.f32.gmra.mrb[0].mxu0 %v850
      %v954 = vpop.f32.mrb[0].mxu0
      %v955 = vadd.f32 %v808, %v954
      %v956 = vpop.f32.mrb[0].mxu0
      %v957 = vadd.f32 %v808, %v956
      %958 = vmatprep.mubr.f32.mxu0 0.0
      %959 = vmatmul.mubr.f32.gmra.mrb[0].mxu0 %v853
      %v960 = vpop.f32.mrb[0].mxu0
      %v961 = vadd.f32 %v813, %v960
      %v962 = vpop.f32.mrb[0].mxu0
      %v963 = vadd.f32 %v813, %v962
      %964 = vmatprep.mubr.f32.mxu0 0.0
      %965 = vmatmul.mubr.f32.gmra.mrb[0].mxu0 %v856
      %v966 = vpop.f32.mrb[0].mxu0
      %v967 = vadd.f32 %v818, %v966
      %v968 = vpop.f32.mrb[0].mxu0
      %v969 = vadd.f32 %v818, %v968
      %970 = vmatprep.mubr.f32.mxu0 0.0
      %971 = vmatmul.mubr.f32.gmra.mrb[0].mxu0 %v859
      %v972 = vpop.f32.mrb[0].mxu0
      %v973 = vadd.f32 %v823, %v972
      %v974 = vpop.f32.mrb[0].mxu0
      %v975 = vadd.f32 %v823, %v974
      %976 = vmatprep.mubr.f32.mxu0 0.0
      %977 = vmatmul.mubr.f32.gmra.mrb[0].mxu0 %v862
      %v978 = vpop.f32.mrb[0].mxu0
      %v979 = vadd.f32 %v828, %v978
      %v980 = vpop.f32.mrb[0].mxu0
      %v981 = vadd.f32 %v828, %v980
      %982 = vmatprep.mubr.f32.mxu0 0.0
      %983 = vmatmul.mubr.f32.gmra.mrb[0].mxu0 %v865
      %v984 = vpop.f32.mrb[0].mxu0
      %v985 = vadd.f32 %v833, %v984
      %v986 = vpop.f32.mrb[0].mxu0
      %v987 = vadd.f32 %v833, %v986
      %988 = vmatprep.mubr.f32.mxu0 0.0
      %989 = vmatmul.mubr.f32.gmra.mrb[0].mxu0 %v868
      %v990 = vpop.f32.mrb[0].mxu0
      %v991 = vadd.f32 %v838, %v990
      %v992 = vpop.f32.mrb[0].mxu0
      %v993 = vadd.f32 %v838, %v992
      %994 = vdwg.mxu0
      %v995 = vtanh.pop %v937
      %v996 = vtanh.pop %v939
      %v997 = vtanh.pop %v943
      %v998 = vtanh.pop %v945
      %v999 = vtanh.pop %v949
      %v1000 = vtanh.pop %v951
      %v1001 = vtanh.pop %v955
      %v1002 = vtanh.pop %v957
      %v1003 = vtanh.pop %v961
      %v1004 = vtanh.pop %v963
      %v1005 = vtanh.pop %v967
      %v1006 = vtanh.pop %v969
      %v1007 = vtanh.pop %v973
      %v1008 = vtanh.pop %v975
      %v1009 = vtanh.pop %v979
      %v1010 = vtanh.pop %v981
      %v1011 = vtanh.pop %v985
      %v1012 = vtanh.pop %v987
      %v1013 = vtanh.pop %v991
      %v1014 = vtanh.pop %v993
      %v1015 = vld [vmem:[%s6] sm:$0xff]
      %v1016 = vld [vmem:[%s7] sm:$0xff]
      %1018 = vset.pattern.permute.xlu0 0
      %1019 = vperm.xlu0 %1018, %v1016
      %v1020 = vpop.permute.xlu0 %1019
      %v1023 = vsel %vm693, %v1015, 0
      %1025 = vmatprep.subr.mxu0 %v996
      %1026 = vmatpush1.msra.mxu0 %v995
      %1027 = vmatprep.subr.mxu0 %v998
      %1028 = vmatpush1.msra.mxu0 %v997
      %1029 = vmatprep.subr.mxu0 %v1000
      %1030 = vmatpush1.msra.mxu0 %v999
      %1031 = vmatprep.subr.mxu0 %v1002
      %1032 = vmatpush1.msra.mxu0 %v1001
      %1033 = vmatprep.subr.mxu0 %v1004
      %1034 = vmatpush1.msra.mxu0 %v1003
      %1035 = vmatprep.subr.mxu0 %v1006
      %1036 = vmatpush1.msra.mxu0 %v1005
      %1037 = vmatprep.subr.mxu0 %v1008
      %1038 = vmatpush1.msra.mxu0 %v1007
      %1039 = vmatprep.subr.mxu0 %v1010
      %1040 = vmatpush1.msra.mxu0 %v1009
      %1041 = vmatprep.subr.mxu0 %v1012
      %1042 = vmatpush1.msra.mxu0 %v1011
      %1043 = vmatprep.subr.mxu0 %v1014
      %1044 = vmatpush1.msra.mxu0 %v1013
      %1045 = vmatprep.subr.mxu0 0.0
      %1046 = vmatpush1.msra.mxu0 0.0
      %1047 = vmatprep.subr.mxu0 0.0
      %1048 = vmatpush1.msra.mxu0 0.0
      %1049 = vmatprep.subr.mxu0 0.0
      %1050 = vmatpush1.msra.mxu0 0.0
      %1051 = vmatprep.subr.mxu0 0.0
      %1052 = vmatpush1.msra.mxu0 0.0
      %1053 = vmatprep.subr.mxu0 0.0
      %1054 = vmatpush1.msra.mxu0 0.0
      %1055 = vmatprep.subr.mxu0 0.0
      %1056 = vmatpush1.msra.mxu0 0.0
      %1057 = vmatprep.subr.mxu0 0.0
      %1058 = vmatpush1.msra.mxu0 0.0
      %1059 = vmatprep.subr.mxu0 0.0
      %1060 = vmatpush1.msra.mxu0 0.0
      %1061 = vmatprep.subr.mxu0 0.0
      %1062 = vmatpush1.msra.mxu0 0.0
      %1063 = vmatprep.subr.mxu0 0.0
      %1064 = vmatpush1.msra.mxu0 0.0
      %1065 = vmatprep.subr.mxu0 0.0
      %1066 = vmatpush1.msra.mxu0 0.0
      %1067 = vmatprep.subr.mxu0 0.0
      %1068 = vmatpush1.msra.mxu0 0.0
      %1069 = vmatprep.subr.mxu0 0.0
      %1070 = vmatpush1.msra.mxu0 0.0
      %1071 = vmatprep.subr.mxu0 0.0
      %1072 = vmatpush1.msra.mxu0 0.0
      %1073 = vmatprep.subr.mxu0 0.0
      %1074 = vmatpush1.msra.mxu0 0.0
      %1075 = vmatprep.subr.mxu0 0.0
      %1076 = vmatpush1.msra.mxu0 0.0
      %1077 = vmatprep.subr.mxu0 0.0
      %1078 = vmatpush1.msra.mxu0 0.0
      %1079 = vmatprep.subr.mxu0 0.0
      %1080 = vmatpush1.msra.mxu0 0.0
      %1081 = vmatprep.subr.mxu0 0.0
      %1082 = vmatpush1.msra.mxu0 0.0
      %1083 = vmatprep.subr.mxu0 0.0
      %1084 = vmatpush1.msra.mxu0 0.0
      %1085 = vmatprep.subr.mxu0 0.0
      %1086 = vmatpush1.msra.mxu0 0.0
      %1087 = vmatprep.subr.mxu0 0.0
      %1088 = vmatpush1.msra.mxu0 0.0
      %1089 = vmatprep.mubr.f32.mxu0 0.0
      %1090 = vmatmul.mubr.f32.gmra.mrb[0].mxu0 %v1023
      %v1091 = vpop.f32.mrb[0].mxu0
      %v1092 = vadd.f32 %v1020, %v1091
      %v1093 = vpop.f32.mrb[0].mxu0
      %v1094 = vadd.f32 %v1020, %v1093
      %1095 = vdwg.mxu0
      %v1096 = vtanh.pop %v1092
      %v1097 = vtanh.pop %v1094
      %v1098 = vmul.f32 %v768, 0.5
      %v1099 = vmul.f32 %v769, 0.5
      %v1100 = vadd.f32 %v1098, 0.5
      %v1101 = vadd.f32 %v1099, 0.5
      %v1104 = vcombine.low %v1100, %v1101
      %1106 = vst [vmem:[%s391] sm:$0xff] %v1104
      %v1107 = vmul.f32 %v1096, 0.5
      %v1108 = vmul.f32 %v1097, 0.5
      %v1109 = vadd.f32 %v1107, 0.5
      %v1110 = vadd.f32 %v1108, 0.5
      %1111 = vst [vmem:[%s397] sm:$0xff] %v1109
      %1112 = vst [vmem:[%s397 + $0x8] sm:$0xff] %v1110
      %s1113 = smul.u32 2, %s24
      %p1114 = scmp.lt.s32.totalorder %s1113, 3
      %s1115 = scalar_select %p1114, %s1113, 3
      %s1116 = smul.addr %s1115, 4
      %s1117 = scalar_lea.vmem %s10, %s1116
      %s1118 = smul.u32 2, %s24
      %p1119 = scmp.lt.s32.totalorder %s1118, 3
      %s1120 = scalar_select %p1119, %s1118, 3
      %s1121 = smul.addr %s1120, 8
      %s1122 = scalar_lea.vmem %s11, %s1121
      // Predicated region
      $region57: #{big_autoencoder_forward.2} parent=55 // pred_check
        %p1123 = pneg %p236
      $region58: #{big_autoencoder_forward.2} parent=55 // pred_check_branch
        %1125 = sbr.rel (%p1123) target = $region60
      $region59: #{big_autoencoder_forward.2} parent=55 // pred_region
        %s1126 = smul.u32 2, %s24
      $region60: #{big_autoencoder_forward.2} parent=55 // pred_fallthru
        _
      // Predicated region
      $region61: #{big_autoencoder_forward.2} parent=55 // pred_check
        %p1127 = pneg %p262
      $region62: #{big_autoencoder_forward.2} parent=55 // pred_check_branch
        %1129 = sbr.rel (%p1127) target = $region64
      $region63: #{big_autoencoder_forward.2} parent=55 // pred_region
        %s1130 = smul.u32 2, %s24
      $region64: #{big_autoencoder_forward.2} parent=55 // pred_fallthru
        _
    $region56: #{big_autoencoder_forward.2} parent=5 // pred_fallthru
      _
    %p1131 = scmp.le.s32.totalorder 2, %s19
    // Predicated region
    $region65: #{big_autoencoder_forward.2} parent=5 // pred_check
      %p1132 = pneg %p1131
    $region66: #{big_autoencoder_forward.2} parent=5 // pred_check_branch
      %1134 = sbr.rel (%p1132) target = $region68
    $region67: #{big_autoencoder_forward.2} parent=5 // pred_region
      %s1135 = ssub.s32 %s19, 2
      // Predicated region
      $region69: #{big_autoencoder_forward.2} parent=67 // pred_check
        %p1136 = pneg %p242
      $region70: #{big_autoencoder_forward.2} parent=67 // pred_check_branch
        %1138 = sbr.rel (%p1136) target = $region72
      $region71: #{big_autoencoder_forward.2} parent=67 // pred_region
        %s1139 = smul.u32 2, %s25
        %p1140 = scmp.lt.s32.totalorder %s1139, 3
        %s1141 = scalar_select %p1140, %s1139, 3
        %s1142 = smul.addr %s1141, 4
        %s1143 = scalar_lea.vmem %s10, %s1142
      $region72: #{big_autoencoder_forward.2} parent=67 // pred_fallthru
        _
      // Predicated region
      $region73: #{big_autoencoder_forward.2} parent=67 // pred_check
        %p1144 = pneg %p268
      $region74: #{big_autoencoder_forward.2} parent=67 // pred_check_branch
        %1146 = sbr.rel (%p1144) target = $region76
      $region75: #{big_autoencoder_forward.2} parent=67 // pred_region
        %s1147 = smul.u32 2, %s25
        %p1148 = scmp.lt.s32.totalorder %s1147, 3
        %s1149 = scalar_select %p1148, %s1147, 3
        %s1150 = smul.addr %s1149, 8
        %s1151 = scalar_lea.vmem %s11, %s1150
      $region76: #{big_autoencoder_forward.2} parent=67 // pred_fallthru
        _
    $region68: #{big_autoencoder_forward.2} parent=5 // pred_fallthru
      _
  $region6: #{big_autoencoder_forward.2} parent=0 // loop_footer
    %s23 = sadd.s32 1, %s19
  $region7: #{big_autoencoder_forward.2} parent=0 // loop_footer_branch
    %18 = sbr.rel target = $region3
  $region8: #{big_autoencoder_forward.2} parent=0 // loop_exit
    _

</llo_original>
